<compile_context>
chip_gen: v5e
topology: v5e:2x2
jax: 0.10.0
libtpu: 0.0.40
codegen_flags: <defaults>
</compile_context>

<pallas_src>
from functools import partial

import numpy as np
import jax
import jax.numpy as jnp
from jax.experimental import pallas as pl
from jax.experimental.pallas import tpu as pltpu


def fusion_kernel(x_ref, w_ref, b_ref, m_ref, o_ref, *, H, W, C, KH, KW,
                  padding, nb):
    # x_ref : (nb, C, H*W)      channel-major, x (+ skip), unpadded
    # w_ref : (2C, KH*KW*C)     duplication-folded weights, tap-major
    # b_ref : (2C, 1)           bias column (f32)
    # m_ref : (KH*KW, H*W)      per-tap validity masks (operand dtype)
    # o_ref : (nb, C, H*W)
    HW = H * W

    stacks = []
    for b in range(nb):
        xs = x_ref[b]                                        # (C, HW)
        taps = []
        for dh in range(KH):
            for dw in range(KW):
                # rolled[p] = xs[p + (dh-padding)*W + (dw-padding)]  (mod HW)
                shift = ((padding - dh) * W + (padding - dw)) % HW
                rolled = pltpu.roll(xs, shift, axis=1) if shift else xs
                if (dh, dw) != (padding, padding):           # kill wrap leakage
                    t = dh * KW + dw
                    rolled = rolled * m_ref[t:t + 1, :]
                taps.append(rolled)
        stacks.append(jnp.concatenate(taps, axis=0))         # (KH*KW*C, HW)
    patches = stacks[0] if nb == 1 else jnp.concatenate(stacks, axis=1)

    # Single MXU contraction with K = KH*KW*C (f32 accumulation on the MXU).
    acc = jax.lax.dot_general(
        w_ref[...], patches,
        dimension_numbers=(((1,), (0,)), ((), ())),
        preferred_element_type=jnp.float32)                  # (2C, nb*HW)
    acc = acc + b_ref[...]                                   # bias added once

    a = acc[:C, :]                                           # GLU: a * sigmoid(g)
    g = acc[C:, :]
    y = (a * jax.nn.sigmoid(g)).astype(o_ref.dtype)          # (C, nb*HW)
    for b in range(nb):
        o_ref[b] = y[:, b * HW:(b + 1) * HW]                 # lane-aligned store


def fusion_layer(x, weight, bias, skip=None, padding=1, images_per_block=None):
    """x: NCHW [N, C, H, W]; weight: OIHW [2C, 2C, KH, KW]; bias: [2C]."""
    N, C, H, W = x.shape
    O, I, KH, KW = weight.shape
    assert O == 2 * C and I == 2 * C
    assert KH == KW == 2 * padding + 1, "FusionLayer uses a 'same'-size conv"
    HW = H * W

    if skip is not None:                  # pre-add skip; skip=None costs nothing
        x = x + skip
    x_flat = x.reshape(N, C, HW)          # channel-major flatten (no transpose)

    # Fold repeat(1,2,1,1) into the weights: both input-channel halves see the
    # same data, so sum them along the OIHW input-channel axis (in f32, then
    # cast back to the operand dtype so MXU operands stay in one dtype).
    wf = weight.astype(jnp.float32)
    wf = wf[:, :C, :, :] + wf[:, C:, :, :]                            # (2C, C, KH, KW)
    w_mat = jnp.transpose(wf, (0, 2, 3, 1)).reshape(O, KH * KW * C)   # tap-major
    w_mat = w_mat.astype(x.dtype)
    b_col = bias.astype(jnp.float32).reshape(O, 1)

    # Host-built per-tap validity masks covering BOTH the row and column wrap
    # of the flat lane roll.  Stored in the operand dtype (no in-kernel casts).
    r = np.arange(HW, dtype=np.int64) // W
    c = np.arange(HW, dtype=np.int64) % W
    rows = []
    for dh in range(KH):
        for dw in range(KW):
            rr = r + dh - padding
            cc = c + dw - padding
            rows.append((rr >= 0) & (rr < H) & (cc >= 0) & (cc < W))
    masks = jnp.asarray(np.stack(rows, axis=0).astype(np.float32)).astype(x.dtype)

    # Batch several images per grid step at small shapes so the MXU RHS is at
    # least ~1024 lanes wide and the per-step overhead is amortized.
    if images_per_block is None:
        images_per_block = max(1, min(N, 1024 // max(HW, 1)))
    nb = int(images_per_block)
    if N % nb:
        pad_n = nb - N % nb
        x_flat = jnp.concatenate(
            [x_flat, jnp.zeros((pad_n, C, HW), x_flat.dtype)], axis=0)
    Np = x_flat.shape[0]
    num_blocks = Np // nb

    # Explicit VMEM budget: double-buffered I/O blocks + resident weight/mask
    # blocks + f32 im2col/accumulator scratch, with headroom; clamped to stay
    # inside v7x's 64 MiB physical VMEM.
    itemsize = x_flat.dtype.itemsize
    io_block = nb * C * HW * itemsize
    resident = (O * KH * KW * C + KH * KW * HW) * itemsize + O * 4
    scratch = (KH * KW * C + 2 * C) * nb * HW * 4
    vmem_limit = int(min(48 << 20,
                         max(4 * io_block + 2 * resident + 2 * scratch,
                             16 << 20)))

    out = pl.pallas_call(
        partial(fusion_kernel, H=H, W=W, C=C, KH=KH, KW=KW,
                padding=padding, nb=nb),
        out_shape=jax.ShapeDtypeStruct((Np, C, HW), x.dtype),
        grid=(num_blocks,),
        in_specs=[
            pl.BlockSpec((nb, C, HW), lambda n: (n, 0, 0)),
            pl.BlockSpec((O, KH * KW * C), lambda n: (0, 0)),
            pl.BlockSpec((O, 1), lambda n: (0, 0)),
            pl.BlockSpec((KH * KW, HW), lambda n: (0, 0)),
        ],
        out_specs=pl.BlockSpec((nb, C, HW), lambda n: (n, 0, 0)),
        compiler_params=pltpu.CompilerParams(
            dimension_semantics=("parallel",),
            vmem_limit_bytes=vmem_limit),
    )(x_flat, w_mat, b_col, masks)

    # TODO(synk): for production SCNet shapes (C>=128, large H*W) add a spatial
    # grid axis that tiles H with a `padding`-row halo (keep W lane-major) so a
    # single block never exceeds v7x's 64 MiB VMEM and both TCs split the work.
    return out[:N].reshape(N, C, H, W)


def reference(x, weight, bias, skip=None, padding=1):
    """Pure-JAX reference mirroring the PyTorch forward (sanity check)."""
    if skip is not None:
        x = x + skip
    x2 = jnp.concatenate([x, x], axis=1)               # repeat(1, 2, 1, 1)
    y = jax.lax.conv_general_dilated(
        x2, weight, window_strides=(1, 1),
        padding=((padding, padding), (padding, padding)),
        dimension_numbers=("NCHW", "OIHW", "NCHW"),
    ) + bias[None, :, None, None]
    C = y.shape[1] // 2
    return y[:, :C] * jax.nn.sigmoid(y[:, C:])


if __name__ == "__main__":
    # Small shapes consistent with the module: N=2, channels=4, spatial 16x16.
    N, C, H, W = 2, 4, 16, 16
    KH = KW = 3

    key = jax.random.PRNGKey(0)
    kx, ks, kw, kb = jax.random.split(key, 4)

    x = jax.random.normal(kx, (N, C, H, W), dtype=jnp.float32)
    skip = jax.random.normal(ks, (N, C, H, W), dtype=jnp.float32)

    # Deterministic Conv2d(2C, 2C, 3) init (PyTorch-style uniform bound).
    fan_in = 2 * C * KH * KW
    bound = 1.0 / float(np.sqrt(fan_in))
    weight = jax.random.uniform(kw, (2 * C, 2 * C, KH, KW), jnp.float32, -bound, bound)
    bias = jax.random.uniform(kb, (2 * C,), jnp.float32, -bound, bound)

    out = jax.block_until_ready(fusion_layer(x, weight, bias, skip=skip))
    ref = reference(x, weight, bias, skip=skip)
    assert out.shape == (N, C, H, W)
    assert jnp.allclose(out, ref, atol=1e-4, rtol=1e-4), "mismatch vs reference"

    # Also exercise the skip=None path (no zeros tensor is built or DMA'd).
    out2 = jax.block_until_ready(fusion_layer(x, weight, bias))
    ref2 = reference(x, weight, bias)
    assert jnp.allclose(out2, ref2, atol=1e-4, rtol=1e-4), "mismatch (no skip)"

    print("KERNEL_OK")
</pallas_src>

<mosaic_0001>
module attributes {stable_mosaic.version = 11 : i64} {
  func.func @fusion_kernel(%arg0: i32, %arg1: memref<2x4x256xf32, #tpu.memory_space<vmem>>, %arg2: memref<8x36xf32, #tpu.memory_space<vmem>>, %arg3: memref<8x1xf32, #tpu.memory_space<vmem>>, %arg4: memref<9x256xf32, #tpu.memory_space<vmem>>, %arg5: memref<2x4x256xf32, #tpu.memory_space<vmem>>) attributes {dimension_semantics = [#tpu.dimension_semantics<parallel>], iteration_bounds = array<i64: 1>, scalar_prefetch = 0 : i64, scratch_operands = 0 : i64, tpu.core_type = #tpu.core_type<tc>, window_params = [{transform_indices = @transform_0, window_bounds = array<i64: 2, 4, 256>}, {pipeline_mode = #tpu.pipeline_mode<synchronous>, transform_indices = @transform_1, window_bounds = array<i64: 8, 36>}, {pipeline_mode = #tpu.pipeline_mode<synchronous>, transform_indices = @transform_2, window_bounds = array<i64: 8, 1>}, {pipeline_mode = #tpu.pipeline_mode<synchronous>, transform_indices = @transform_3, window_bounds = array<i64: 9, 256>}, {transform_indices = @transform_4, window_bounds = array<i64: 2, 4, 256>}]} {
    %c0 = arith.constant 0 : index
    %c0_0 = arith.constant 0 : index
    %c0_1 = arith.constant 0 : index
    %0 = vector.load %arg1[%c0, %c0_0, %c0_1] : memref<2x4x256xf32, #tpu.memory_space<vmem>>, vector<1x4x256xf32>
    %1 = vector.shape_cast %0 : vector<1x4x256xf32> to vector<4x256xf32>
    %c17_i32 = arith.constant 17 : i32
    %2 = tpu.dynamic_rotate %1 by %c17_i32 dim 1 : vector<4x256xf32>, i32 -> vector<4x256xf32>
    %c0_2 = arith.constant 0 : index
    %c0_3 = arith.constant 0 : index
    %3 = vector.load %arg4[%c0_2, %c0_3] : memref<9x256xf32, #tpu.memory_space<vmem>>, vector<1x256xf32>
    %4 = vector.broadcast %3 : vector<1x256xf32> to vector<4x256xf32>
    %5 = arith.mulf %2, %4 : vector<4x256xf32>
    %c16_i32 = arith.constant 16 : i32
    %6 = tpu.dynamic_rotate %1 by %c16_i32 dim 1 : vector<4x256xf32>, i32 -> vector<4x256xf32>
    %c1 = arith.constant 1 : index
    %c0_4 = arith.constant 0 : index
    %7 = vector.load %arg4[%c1, %c0_4] : memref<9x256xf32, #tpu.memory_space<vmem>>, vector<1x256xf32>
    %8 = vector.broadcast %7 : vector<1x256xf32> to vector<4x256xf32>
    %9 = arith.mulf %6, %8 : vector<4x256xf32>
    %c15_i32 = arith.constant 15 : i32
    %10 = tpu.dynamic_rotate %1 by %c15_i32 dim 1 : vector<4x256xf32>, i32 -> vector<4x256xf32>
    %c2 = arith.constant 2 : index
    %c0_5 = arith.constant 0 : index
    %11 = vector.load %arg4[%c2, %c0_5] : memref<9x256xf32, #tpu.memory_space<vmem>>, vector<1x256xf32>
    %12 = vector.broadcast %11 : vector<1x256xf32> to vector<4x256xf32>
    %13 = arith.mulf %10, %12 : vector<4x256xf32>
    %c1_i32 = arith.constant 1 : i32
    %14 = tpu.dynamic_rotate %1 by %c1_i32 dim 1 : vector<4x256xf32>, i32 -> vector<4x256xf32>
    %c3 = arith.constant 3 : index
    %c0_6 = arith.constant 0 : index
    %15 = vector.load %arg4[%c3, %c0_6] : memref<9x256xf32, #tpu.memory_space<vmem>>, vector<1x256xf32>
    %16 = vector.broadcast %15 : vector<1x256xf32> to vector<4x256xf32>
    %17 = arith.mulf %14, %16 : vector<4x256xf32>
    %c255_i32 = arith.constant 255 : i32
    %18 = tpu.dynamic_rotate %1 by %c255_i32 dim 1 : vector<4x256xf32>, i32 -> vector<4x256xf32>
    %c5 = arith.constant 5 : index
    %c0_7 = arith.constant 0 : index
    %19 = vector.load %arg4[%c5, %c0_7] : memref<9x256xf32, #tpu.memory_space<vmem>>, vector<1x256xf32>
    %20 = vector.broadcast %19 : vector<1x256xf32> to vector<4x256xf32>
    %21 = arith.mulf %18, %20 : vector<4x256xf32>
    %c241_i32 = arith.constant 241 : i32
    %22 = tpu.dynamic_rotate %1 by %c241_i32 dim 1 : vector<4x256xf32>, i32 -> vector<4x256xf32>
    %c6 = arith.constant 6 : index
    %c0_8 = arith.constant 0 : index
    %23 = vector.load %arg4[%c6, %c0_8] : memref<9x256xf32, #tpu.memory_space<vmem>>, vector<1x256xf32>
    %24 = vector.broadcast %23 : vector<1x256xf32> to vector<4x256xf32>
    %25 = arith.mulf %22, %24 : vector<4x256xf32>
    %c240_i32 = arith.constant 240 : i32
    %26 = tpu.dynamic_rotate %1 by %c240_i32 dim 1 : vector<4x256xf32>, i32 -> vector<4x256xf32>
    %c7 = arith.constant 7 : index
    %c0_9 = arith.constant 0 : index
    %27 = vector.load %arg4[%c7, %c0_9] : memref<9x256xf32, #tpu.memory_space<vmem>>, vector<1x256xf32>
    %28 = vector.broadcast %27 : vector<1x256xf32> to vector<4x256xf32>
    %29 = arith.mulf %26, %28 : vector<4x256xf32>
    %c239_i32 = arith.constant 239 : i32
    %30 = tpu.dynamic_rotate %1 by %c239_i32 dim 1 : vector<4x256xf32>, i32 -> vector<4x256xf32>
    %c8 = arith.constant 8 : index
    %c0_10 = arith.constant 0 : index
    %31 = vector.load %arg4[%c8, %c0_10] : memref<9x256xf32, #tpu.memory_space<vmem>>, vector<1x256xf32>
    %32 = vector.broadcast %31 : vector<1x256xf32> to vector<4x256xf32>
    %33 = arith.mulf %30, %32 : vector<4x256xf32>
    %34 = tpu.concatenate %5, %9, %13, %17, %1, %21, %25, %29, %33 in 0 : vector<4x256xf32>, vector<4x256xf32>, vector<4x256xf32>, vector<4x256xf32>, vector<4x256xf32>, vector<4x256xf32>, vector<4x256xf32>, vector<4x256xf32>, vector<4x256xf32> -> vector<36x256xf32>
    %c1_11 = arith.constant 1 : index
    %c0_12 = arith.constant 0 : index
    %c0_13 = arith.constant 0 : index
    %35 = vector.load %arg1[%c1_11, %c0_12, %c0_13] : memref<2x4x256xf32, #tpu.memory_space<vmem>>, vector<1x4x256xf32>
    %36 = vector.shape_cast %35 : vector<1x4x256xf32> to vector<4x256xf32>
    %c17_i32_14 = arith.constant 17 : i32
    %37 = tpu.dynamic_rotate %36 by %c17_i32_14 dim 1 : vector<4x256xf32>, i32 -> vector<4x256xf32>
    %c0_15 = arith.constant 0 : index
    %c0_16 = arith.constant 0 : index
    %38 = vector.load %arg4[%c0_15, %c0_16] : memref<9x256xf32, #tpu.memory_space<vmem>>, vector<1x256xf32>
    %39 = vector.broadcast %38 : vector<1x256xf32> to vector<4x256xf32>
    %40 = arith.mulf %37, %39 : vector<4x256xf32>
    %c16_i32_17 = arith.constant 16 : i32
    %41 = tpu.dynamic_rotate %36 by %c16_i32_17 dim 1 : vector<4x256xf32>, i32 -> vector<4x256xf32>
    %c1_18 = arith.constant 1 : index
    %c0_19 = arith.constant 0 : index
    %42 = vector.load %arg4[%c1_18, %c0_19] : memref<9x256xf32, #tpu.memory_space<vmem>>, vector<1x256xf32>
    %43 = vector.broadcast %42 : vector<1x256xf32> to vector<4x256xf32>
    %44 = arith.mulf %41, %43 : vector<4x256xf32>
    %c15_i32_20 = arith.constant 15 : i32
    %45 = tpu.dynamic_rotate %36 by %c15_i32_20 dim 1 : vector<4x256xf32>, i32 -> vector<4x256xf32>
    %c2_21 = arith.constant 2 : index
    %c0_22 = arith.constant 0 : index
    %46 = vector.load %arg4[%c2_21, %c0_22] : memref<9x256xf32, #tpu.memory_space<vmem>>, vector<1x256xf32>
    %47 = vector.broadcast %46 : vector<1x256xf32> to vector<4x256xf32>
    %48 = arith.mulf %45, %47 : vector<4x256xf32>
    %c1_i32_23 = arith.constant 1 : i32
    %49 = tpu.dynamic_rotate %36 by %c1_i32_23 dim 1 : vector<4x256xf32>, i32 -> vector<4x256xf32>
    %c3_24 = arith.constant 3 : index
    %c0_25 = arith.constant 0 : index
    %50 = vector.load %arg4[%c3_24, %c0_25] : memref<9x256xf32, #tpu.memory_space<vmem>>, vector<1x256xf32>
    %51 = vector.broadcast %50 : vector<1x256xf32> to vector<4x256xf32>
    %52 = arith.mulf %49, %51 : vector<4x256xf32>
    %c255_i32_26 = arith.constant 255 : i32
    %53 = tpu.dynamic_rotate %36 by %c255_i32_26 dim 1 : vector<4x256xf32>, i32 -> vector<4x256xf32>
    %c5_27 = arith.constant 5 : index
    %c0_28 = arith.constant 0 : index
    %54 = vector.load %arg4[%c5_27, %c0_28] : memref<9x256xf32, #tpu.memory_space<vmem>>, vector<1x256xf32>
    %55 = vector.broadcast %54 : vector<1x256xf32> to vector<4x256xf32>
    %56 = arith.mulf %53, %55 : vector<4x256xf32>
    %c241_i32_29 = arith.constant 241 : i32
    %57 = tpu.dynamic_rotate %36 by %c241_i32_29 dim 1 : vector<4x256xf32>, i32 -> vector<4x256xf32>
    %c6_30 = arith.constant 6 : index
    %c0_31 = arith.constant 0 : index
    %58 = vector.load %arg4[%c6_30, %c0_31] : memref<9x256xf32, #tpu.memory_space<vmem>>, vector<1x256xf32>
    %59 = vector.broadcast %58 : vector<1x256xf32> to vector<4x256xf32>
    %60 = arith.mulf %57, %59 : vector<4x256xf32>
    %c240_i32_32 = arith.constant 240 : i32
    %61 = tpu.dynamic_rotate %36 by %c240_i32_32 dim 1 : vector<4x256xf32>, i32 -> vector<4x256xf32>
    %c7_33 = arith.constant 7 : index
    %c0_34 = arith.constant 0 : index
    %62 = vector.load %arg4[%c7_33, %c0_34] : memref<9x256xf32, #tpu.memory_space<vmem>>, vector<1x256xf32>
    %63 = vector.broadcast %62 : vector<1x256xf32> to vector<4x256xf32>
    %64 = arith.mulf %61, %63 : vector<4x256xf32>
    %c239_i32_35 = arith.constant 239 : i32
    %65 = tpu.dynamic_rotate %36 by %c239_i32_35 dim 1 : vector<4x256xf32>, i32 -> vector<4x256xf32>
    %c8_36 = arith.constant 8 : index
    %c0_37 = arith.constant 0 : index
    %66 = vector.load %arg4[%c8_36, %c0_37] : memref<9x256xf32, #tpu.memory_space<vmem>>, vector<1x256xf32>
    %67 = vector.broadcast %66 : vector<1x256xf32> to vector<4x256xf32>
    %68 = arith.mulf %65, %67 : vector<4x256xf32>
    %69 = tpu.concatenate %40, %44, %48, %52, %36, %56, %60, %64, %68 in 0 : vector<4x256xf32>, vector<4x256xf32>, vector<4x256xf32>, vector<4x256xf32>, vector<4x256xf32>, vector<4x256xf32>, vector<4x256xf32>, vector<4x256xf32>, vector<4x256xf32> -> vector<36x256xf32>
    %70 = tpu.concatenate %34, %69 in 1 : vector<36x256xf32>, vector<36x256xf32> -> vector<36x512xf32>
    %c0_38 = arith.constant 0 : index
    %c0_39 = arith.constant 0 : index
    %71 = vector.load %arg2[%c0_38, %c0_39] : memref<8x36xf32, #tpu.memory_space<vmem>>, vector<8x36xf32>
    %cst = arith.constant dense<0.000000e+00> : vector<8x512xf32>
    %72 = tpu.matmul %71, %70, %cst {dimension_numbers = #tpu.dot_dimension_numbers<[1], [0], [0], [1], [0, 0, 1, 1], [], []>} : vector<8x36xf32>, vector<36x512xf32>, vector<8x512xf32> -> vector<8x512xf32>
    %c0_40 = arith.constant 0 : index
    %c0_41 = arith.constant 0 : index
    %73 = vector.load %arg3[%c0_40, %c0_41] : memref<8x1xf32, #tpu.memory_space<vmem>>, vector<8x1xf32>
    %74 = vector.broadcast %73 : vector<8x1xf32> to vector<8x512xf32>
    %75 = arith.addf %72, %74 : vector<8x512xf32>
    %76 = vector.extract_strided_slice %75 {offsets = [0, 0], sizes = [4, 512], strides = [1, 1]} : vector<8x512xf32> to vector<4x512xf32>
    %77 = vector.extract_strided_slice %75 {offsets = [4, 0], sizes = [4, 512], strides = [1, 1]} : vector<8x512xf32> to vector<4x512xf32>
    %78 = arith.negf %77 : vector<4x512xf32>
    %79 = math.exp %78 : vector<4x512xf32>
    %cst_42 = arith.constant 1.000000e+00 : f32
    %80 = vector.broadcast %cst_42 : f32 to vector<4x512xf32>
    %81 = arith.addf %80, %79 : vector<4x512xf32>
    %82 = arith.divf %80, %81 : vector<4x512xf32>
    %83 = arith.mulf %76, %82 : vector<4x512xf32>
    %84 = vector.extract_strided_slice %83 {offsets = [0, 0], sizes = [4, 256], strides = [1, 1]} : vector<4x512xf32> to vector<4x256xf32>
    %c0_43 = arith.constant 0 : index
    %c0_44 = arith.constant 0 : index
    %c0_45 = arith.constant 0 : index
    %85 = vector.load %arg5[%c0_43, %c0_44, %c0_45] : memref<2x4x256xf32, #tpu.memory_space<vmem>>, vector<1x4x256xf32>
    %86 = vector.shape_cast %85 : vector<1x4x256xf32> to vector<4x256xf32>
    %87 = vector.shape_cast %84 : vector<4x256xf32> to vector<1x4x256xf32>
    tpu.vector_store %arg5[%c0_43, %c0_44, %c0_45], %87 {strides = array<i32>} : memref<2x4x256xf32, #tpu.memory_space<vmem>>, vector<1x4x256xf32>,
    %88 = vector.extract_strided_slice %83 {offsets = [0, 256], sizes = [4, 256], strides = [1, 1]} : vector<4x512xf32> to vector<4x256xf32>
    %c1_46 = arith.constant 1 : index
    %c0_47 = arith.constant 0 : index
    %c0_48 = arith.constant 0 : index
    %89 = vector.load %arg5[%c1_46, %c0_47, %c0_48] : memref<2x4x256xf32, #tpu.memory_space<vmem>>, vector<1x4x256xf32>
    %90 = vector.shape_cast %89 : vector<1x4x256xf32> to vector<4x256xf32>
    %91 = vector.shape_cast %88 : vector<4x256xf32> to vector<1x4x256xf32>
    tpu.vector_store %arg5[%c1_46, %c0_47, %c0_48], %91 {strides = array<i32>} : memref<2x4x256xf32, #tpu.memory_space<vmem>>, vector<1x4x256xf32>,
    return
  }
  func.func @transform_0(%arg0: i32) -> (i32, i32, i32) {
    %c0_i32 = arith.constant 0 : i32
    %c0_i32_0 = arith.constant 0 : i32
    %c0_i32_1 = arith.constant 0 : i32
    return %arg0, %c0_i32, %c0_i32_0 : i32, i32, i32
  }
  func.func @transform_1(%arg0: i32) -> (i32, i32) {
    %c0_i32 = arith.constant 0 : i32
    %c0_i32_0 = arith.constant 0 : i32
    %c0_i32_1 = arith.constant 0 : i32
    return %c0_i32, %c0_i32_0 : i32, i32
  }
  func.func @transform_2(%arg0: i32) -> (i32, i32) {
    %c0_i32 = arith.constant 0 : i32
    %c0_i32_0 = arith.constant 0 : i32
    %c0_i32_1 = arith.constant 0 : i32
    return %c0_i32, %c0_i32_0 : i32, i32
  }
  func.func @transform_3(%arg0: i32) -> (i32, i32) {
    %c0_i32 = arith.constant 0 : i32
    %c0_i32_0 = arith.constant 0 : i32
    %c0_i32_1 = arith.constant 0 : i32
    return %c0_i32, %c0_i32_0 : i32, i32
  }
  func.func @transform_4(%arg0: i32) -> (i32, i32, i32) {
    %c0_i32 = arith.constant 0 : i32
    %c0_i32_0 = arith.constant 0 : i32
    %c0_i32_1 = arith.constant 0 : i32
    return %arg0, %c0_i32, %c0_i32_0 : i32, i32, i32
  }
}

</mosaic_0001>

<llo_original>
// kernel: tpu_custom_call.1
$region0: #{tpu_custom_call.1}
  #allocation0 [shape = 'u32[]', space=smem, size = 0x4, offset = 0x4, fixed_abs, tag = 'smem constant byte address 0x4 - core index']
  #allocation1 [shape = 'u32[72,128]{1,0:T(1,128)}', space=vmem, size = 0x9000, scoped, tag = 'internal scratch']
  %s0 = inlined_call_operand.hbm [shape: f32[2,4,256], index: 0, kind: input, shape index: {}]
  %s1 = inlined_call_operand.vmem [shape: f32[8,36], index: 1, kind: input, shape index: {}]
  %s2 = inlined_call_operand.vmem [shape: f32[8,1], index: 2, kind: input, shape index: {}]
  %s3 = inlined_call_operand.hbm [shape: f32[9,256], index: 3, kind: input, shape index: {}]
  %s4 = inlined_call_operand.hbm [shape: f32[2,4,256], index: 4, kind: output, shape index: {}]
  %s5 = sld [smem:[#allocation0]]
  $region34: #{tpu_custom_call.1} parent=0
    _
  %s7 = ssub.s32 1, %s5
  %s8 = scalar_select 0, %s7, %s5
  $region1: #{tpu_custom_call.1} parent=0
    #allocation2 [shape = 'u8[8192]{0}', space=vmem, size = 0x2000, scoped, tag = 'input window, operand 0, single buffered']
    #allocation3 [shape = 's32[1]{0}', space=sflag, size = 0x4, scoped, tag = 'scoped memory for tpu_custom_call.1']
    #allocation4 [shape = 's32[1]{0}', space=sflag, size = 0x4, scoped, tag = 'scoped memory for tpu_custom_call.1']
    #allocation5 [shape = 'u8[16384]{0}', space=vmem, size = 0x4000, scoped, tag = 'input window, operand 3, single buffered']
    #allocation6 [shape = 's32[1]{0}', space=sflag, size = 0x4, scoped, tag = 'scoped memory for tpu_custom_call.1']
    #allocation7 [shape = 'u8[8192]{0}', space=vmem, size = 0x2000, scoped, tag = 'output window, operand 0, single buffered']
    %9 = vsyncpa [#allocation3], 0
    %10 = vsyncpa [#allocation6], 0
    %11 = vsyncpa [#allocation4], 0
    // Predicated region
    $region2: #{tpu_custom_call.1} parent=1 // pred_check
      _
    $region3: #{tpu_custom_call.1} parent=1 // pred_check_branch
      %13 = sbr.rel (0) target = $region5
    $region4: #{tpu_custom_call.1} parent=1 // pred_region
      %15 = vsyncadd [#allocation3], 0
      %s16 = sshll.u32 %s0, 4
      %s17 = int_to_ptr.hbm [resolvable:$true] %s16
      %s18 = sshll.u32 [#allocation2], 4
      %s19 = int_to_ptr.vmem [resolvable:$true] %s18
      %24 = dma.hbm_to_vmem [thread:$0]  %s17, 256, %s19, [#allocation3], 128, 128, 8
    $region5: #{tpu_custom_call.1} parent=1 // pred_fallthru
      _
    // Predicated region
    $region6: #{tpu_custom_call.1} parent=1 // pred_check
      _
    $region7: #{tpu_custom_call.1} parent=1 // pred_check_branch
      %26 = sbr.rel (0) target = $region9
    $region8: #{tpu_custom_call.1} parent=1 // pred_region
      _
    $region9: #{tpu_custom_call.1} parent=1 // pred_fallthru
      _
    // Predicated region
    $region10: #{tpu_custom_call.1} parent=1 // pred_check
      _
    $region11: #{tpu_custom_call.1} parent=1 // pred_check_branch
      %28 = sbr.rel (0) target = $region13
    $region12: #{tpu_custom_call.1} parent=1 // pred_region
      _
    $region13: #{tpu_custom_call.1} parent=1 // pred_fallthru
      _
    // Predicated region
    $region14: #{tpu_custom_call.1} parent=1 // pred_check
      _
    $region15: #{tpu_custom_call.1} parent=1 // pred_check_branch
      %30 = sbr.rel (0) target = $region17
    $region16: #{tpu_custom_call.1} parent=1 // pred_region
      %32 = vsyncadd [#allocation6], 0
      %s33 = sshll.u32 %s3, 4
      %s34 = int_to_ptr.hbm [resolvable:$true] %s33
      %s35 = sshll.u32 [#allocation5], 4
      %s36 = int_to_ptr.vmem [resolvable:$true] %s35
      %41 = dma.hbm_to_vmem [thread:$0]  %s34, 512, %s36, [#allocation6], 256, 256, 16
    $region17: #{tpu_custom_call.1} parent=1 // pred_fallthru
      _
    // Predicated region
    $region18: #{tpu_custom_call.1} parent=1 // pred_check
      _
    $region19: #{tpu_custom_call.1} parent=1 // pred_check_branch
      %43 = sbr.rel (0) target = $region21
    $region20: #{tpu_custom_call.1} parent=1 // pred_region
      %45 = dma.done [#allocation3], 256
    $region21: #{tpu_custom_call.1} parent=1 // pred_fallthru
      _
    // Predicated region
    $region22: #{tpu_custom_call.1} parent=1 // pred_check
      _
    $region23: #{tpu_custom_call.1} parent=1 // pred_check_branch
      %47 = sbr.rel (0) target = $region25
    $region24: #{tpu_custom_call.1} parent=1 // pred_region
      %49 = dma.done [#allocation6], 512
    $region25: #{tpu_custom_call.1} parent=1 // pred_fallthru
      _
    %v50 = vld [vmem:[#allocation2] sm:$0xff]
    %52 = vst [vmem:[#allocation1] ss:$2 sm:$0xff] %v50
    %v53 = vld.sshfl [vmem:[#allocation1] sm:$0xff pattern:$0x75316420]
    %v54 = vld.sshfl [vmem:[#allocation1 + $0x8] sm:$0xff pattern:$0x75316420]
    %57 = vrot.lane.b32.xlu0 %v53, 17
    %v58 = vpop.permute.xlu0 %57
    %59 = vrot.lane.b32.xlu0 %v54, 17
    %v60 = vpop.permute.xlu0 %59
    %v61 = vlaneseq
    %v62 = vand.u32 %v61, 127
    %vm63 = vcmp.lt.s32.totalorder %v62, 17
    %v64 = vsel %vm63, %v58, %v60
    %v65 = vsel %vm63, %v60, %v58
    %v66 = vld [vmem:[#allocation5] ss:$8 sm:$0x3]
    %v68 = vperm.slane %v66, 0
    %v69 = vperm.slane %v66, 1
    %v72 = vmul.f32 %v65, %v68
    %v73 = vmul.f32 %v64, %v69
    %74 = vst [vmem:[#allocation1] ss:$2 sm:$0xff] %v50
    %v75 = vld.sshfl [vmem:[#allocation1] sm:$0xff pattern:$0x75316420]
    %v76 = vld.sshfl [vmem:[#allocation1 + $0x8] sm:$0xff pattern:$0x75316420]
    %79 = vrot.lane.b32.xlu0 %v75, 16
    %v80 = vpop.permute.xlu0 %79
    %81 = vrot.lane.b32.xlu0 %v76, 16
    %v82 = vpop.permute.xlu0 %81
    %vm83 = vcmp.lt.s32.totalorder %v62, 16
    %v84 = vsel %vm83, %v80, %v82
    %v85 = vsel %vm83, %v82, %v80
    %s86 = scalar_lea.vmem [#allocation5], 1
    %v87 = vld [vmem:[%s86] ss:$8 sm:$0x3]
    %v89 = vperm.slane %v87, 0
    %v90 = vperm.slane %v87, 1
    %v93 = vmul.f32 %v85, %v89
    %v94 = vmul.f32 %v84, %v90
    %95 = vst [vmem:[#allocation1] ss:$2 sm:$0xff] %v50
    %v96 = vld.sshfl [vmem:[#allocation1] sm:$0xff pattern:$0x75316420]
    %v97 = vld.sshfl [vmem:[#allocation1 + $0x8] sm:$0xff pattern:$0x75316420]
    %100 = vrot.lane.b32.xlu0 %v96, 15
    %v101 = vpop.permute.xlu0 %100
    %102 = vrot.lane.b32.xlu0 %v97, 15
    %v103 = vpop.permute.xlu0 %102
    %vm104 = vcmp.lt.s32.totalorder %v62, 15
    %v105 = vsel %vm104, %v101, %v103
    %v106 = vsel %vm104, %v103, %v101
    %s107 = scalar_lea.vmem [#allocation5], 2
    %v108 = vld [vmem:[%s107] ss:$8 sm:$0x3]
    %v110 = vperm.slane %v108, 0
    %v111 = vperm.slane %v108, 1
    %v114 = vmul.f32 %v106, %v110
    %v115 = vmul.f32 %v105, %v111
    %116 = vst [vmem:[#allocation1] ss:$2 sm:$0xff] %v50
    %v117 = vld.sshfl [vmem:[#allocation1] sm:$0xff pattern:$0x75316420]
    %v118 = vld.sshfl [vmem:[#allocation1 + $0x8] sm:$0xff pattern:$0x75316420]
    %121 = vrot.lane.b32.xlu0 %v117, 1
    %v122 = vpop.permute.xlu0 %121
    %123 = vrot.lane.b32.xlu0 %v118, 1
    %v124 = vpop.permute.xlu0 %123
    %vm125 = vcmp.lt.s32.totalorder %v62, 1
    %v126 = vsel %vm125, %v122, %v124
    %v127 = vsel %vm125, %v124, %v122
    %s128 = scalar_lea.vmem [#allocation5], 3
    %v129 = vld [vmem:[%s128] ss:$8 sm:$0x3]
    %v131 = vperm.slane %v129, 0
    %v132 = vperm.slane %v129, 1
    %v135 = vmul.f32 %v127, %v131
    %v136 = vmul.f32 %v126, %v132
    %137 = vst [vmem:[#allocation1] ss:$2 sm:$0xff] %v50
    %v138 = vld.sshfl [vmem:[#allocation1] sm:$0xff pattern:$0x75316420]
    %v139 = vld.sshfl [vmem:[#allocation1 + $0x8] sm:$0xff pattern:$0x75316420]
    %142 = vrot.lane.b32.xlu0 %v138, 127
    %v143 = vpop.permute.xlu0 %142
    %144 = vrot.lane.b32.xlu0 %v139, 127
    %v145 = vpop.permute.xlu0 %144
    %vm146 = vcmp.lt.s32.totalorder %v62, 127
    %v147 = vsel %vm146, %v143, %v145
    %v148 = vsel %vm146, %v145, %v143
    %s149 = scalar_lea.vmem [#allocation5], 5
    %v150 = vld [vmem:[%s149] ss:$8 sm:$0x3]
    %v152 = vperm.slane %v150, 0
    %v153 = vperm.slane %v150, 1
    %v156 = vmul.f32 %v147, %v152
    %v157 = vmul.f32 %v148, %v153
    %158 = vst [vmem:[#allocation1] ss:$2 sm:$0xff] %v50
    %v159 = vld.sshfl [vmem:[#allocation1] sm:$0xff pattern:$0x75316420]
    %v160 = vld.sshfl [vmem:[#allocation1 + $0x8] sm:$0xff pattern:$0x75316420]
    %163 = vrot.lane.b32.xlu0 %v159, 113
    %v164 = vpop.permute.xlu0 %163
    %165 = vrot.lane.b32.xlu0 %v160, 113
    %v166 = vpop.permute.xlu0 %165
    %vm167 = vcmp.lt.s32.totalorder %v62, 113
    %v168 = vsel %vm167, %v164, %v166
    %v169 = vsel %vm167, %v166, %v164
    %s170 = scalar_lea.vmem [#allocation5], 6
    %v171 = vld [vmem:[%s170] ss:$8 sm:$0x3]
    %v173 = vperm.slane %v171, 0
    %v174 = vperm.slane %v171, 1
    %v177 = vmul.f32 %v168, %v173
    %v178 = vmul.f32 %v169, %v174
    %179 = vst [vmem:[#allocation1] ss:$2 sm:$0xff] %v50
    %v180 = vld.sshfl [vmem:[#allocation1] sm:$0xff pattern:$0x75316420]
    %v181 = vld.sshfl [vmem:[#allocation1 + $0x8] sm:$0xff pattern:$0x75316420]
    %184 = vrot.lane.b32.xlu0 %v180, 112
    %v185 = vpop.permute.xlu0 %184
    %186 = vrot.lane.b32.xlu0 %v181, 112
    %v187 = vpop.permute.xlu0 %186
    %vm188 = vcmp.lt.s32.totalorder %v62, 112
    %v189 = vsel %vm188, %v185, %v187
    %v190 = vsel %vm188, %v187, %v185
    %s191 = scalar_lea.vmem [#allocation5], 7
    %v192 = vld [vmem:[%s191] ss:$8 sm:$0x3]
    %v194 = vperm.slane %v192, 0
    %v195 = vperm.slane %v192, 1
    %v198 = vmul.f32 %v189, %v194
    %v199 = vmul.f32 %v190, %v195
    %200 = vst [vmem:[#allocation1] ss:$2 sm:$0xff] %v50
    %v201 = vld.sshfl [vmem:[#allocation1] sm:$0xff pattern:$0x75316420]
    %v202 = vld.sshfl [vmem:[#allocation1 + $0x8] sm:$0xff pattern:$0x75316420]
    %205 = vrot.lane.b32.xlu0 %v201, 111
    %v206 = vpop.permute.xlu0 %205
    %207 = vrot.lane.b32.xlu0 %v202, 111
    %v208 = vpop.permute.xlu0 %207
    %vm209 = vcmp.lt.s32.totalorder %v62, 111
    %v210 = vsel %vm209, %v206, %v208
    %v211 = vsel %vm209, %v208, %v206
    %s212 = scalar_lea.vmem [#allocation5], 16
    %v213 = vld [vmem:[%s212] ss:$8 sm:$0x3]
    %v215 = vperm.slane %v213, 0
    %v216 = vperm.slane %v213, 1
    %v219 = vmul.f32 %v210, %v215
    %v220 = vmul.f32 %v211, %v216
    %v223 = vrot.slane %v93, 4
    %v224 = vrot.slane %v94, 4
    %v229 = vrot.slane %v135, 4
    %v230 = vrot.slane %v136, 4
    %233 = vst [vmem:[#allocation1] ss:$2 sm:$0xff] %v50
    %v234 = vld.sshfl [vmem:[#allocation1] sm:$0xff pattern:$0x75316420]
    %v235 = vld.sshfl [vmem:[#allocation1 + $0x8] sm:$0xff pattern:$0x75316420]
    %v240 = vrot.slane %v156, 4
    %v241 = vrot.slane %v157, 4
    %v246 = vrot.slane %v198, 4
    %v247 = vrot.slane %v199, 4
    %vm250 = vcmask 1043456
    %v251 = vsel %vm250, %v72, %v223
    %v252 = vsel %vm250, %v73, %v224
    %v253 = vsel %vm250, %v114, %v229
    %v254 = vsel %vm250, %v115, %v230
    %v255 = vsel %vm250, %v234, %v240
    %v256 = vsel %vm250, %v235, %v241
    %v257 = vsel %vm250, %v177, %v246
    %v258 = vsel %vm250, %v178, %v247
    %s259 = scalar_lea.vmem [#allocation2], 8
    %v260 = vld [vmem:[%s259] sm:$0xff]
    %262 = vst [vmem:[#allocation1] ss:$2 sm:$0xff] %v260
    %v263 = vld.sshfl [vmem:[#allocation1] sm:$0xff pattern:$0x75316420]
    %v264 = vld.sshfl [vmem:[#allocation1 + $0x8] sm:$0xff pattern:$0x75316420]
    %267 = vrot.lane.b32.xlu0 %v263, 17
    %v268 = vpop.permute.xlu0 %267
    %269 = vrot.lane.b32.xlu0 %v264, 17
    %v270 = vpop.permute.xlu0 %269
    %v271 = vsel %vm63, %v268, %v270
    %v272 = vsel %vm63, %v270, %v268
    %v273 = vmul.f32 %v272, %v68
    %v274 = vmul.f32 %v271, %v69
    %275 = vst [vmem:[#allocation1] ss:$2 sm:$0xff] %v260
    %v276 = vld.sshfl [vmem:[#allocation1] sm:$0xff pattern:$0x75316420]
    %v277 = vld.sshfl [vmem:[#allocation1 + $0x8] sm:$0xff pattern:$0x75316420]
    %280 = vrot.lane.b32.xlu0 %v276, 16
    %v281 = vpop.permute.xlu0 %280
    %282 = vrot.lane.b32.xlu0 %v277, 16
    %v283 = vpop.permute.xlu0 %282
    %v284 = vsel %vm83, %v281, %v283
    %v285 = vsel %vm83, %v283, %v281
    %v286 = vmul.f32 %v285, %v89
    %v287 = vmul.f32 %v284, %v90
    %288 = vst [vmem:[#allocation1] ss:$2 sm:$0xff] %v260
    %v289 = vld.sshfl [vmem:[#allocation1] sm:$0xff pattern:$0x75316420]
    %v290 = vld.sshfl [vmem:[#allocation1 + $0x8] sm:$0xff pattern:$0x75316420]
    %293 = vrot.lane.b32.xlu0 %v289, 15
    %v294 = vpop.permute.xlu0 %293
    %295 = vrot.lane.b32.xlu0 %v290, 15
    %v296 = vpop.permute.xlu0 %295
    %v297 = vsel %vm104, %v294, %v296
    %v298 = vsel %vm104, %v296, %v294
    %v299 = vmul.f32 %v298, %v110
    %v300 = vmul.f32 %v297, %v111
    %301 = vst [vmem:[#allocation1] ss:$2 sm:$0xff] %v260
    %v302 = vld.sshfl [vmem:[#allocation1] sm:$0xff pattern:$0x75316420]
    %v303 = vld.sshfl [vmem:[#allocation1 + $0x8] sm:$0xff pattern:$0x75316420]
    %306 = vrot.lane.b32.xlu0 %v302, 1
    %v307 = vpop.permute.xlu0 %306
    %308 = vrot.lane.b32.xlu0 %v303, 1
    %v309 = vpop.permute.xlu0 %308
    %v310 = vsel %vm125, %v307, %v309
    %v311 = vsel %vm125, %v309, %v307
    %v312 = vmul.f32 %v311, %v131
    %v313 = vmul.f32 %v310, %v132
    %314 = vst [vmem:[#allocation1] ss:$2 sm:$0xff] %v260
    %v315 = vld.sshfl [vmem:[#allocation1] sm:$0xff pattern:$0x75316420]
    %v316 = vld.sshfl [vmem:[#allocation1 + $0x8] sm:$0xff pattern:$0x75316420]
    %319 = vrot.lane.b32.xlu0 %v315, 127
    %v320 = vpop.permute.xlu0 %319
    %321 = vrot.lane.b32.xlu0 %v316, 127
    %v322 = vpop.permute.xlu0 %321
    %v323 = vsel %vm146, %v320, %v322
    %v324 = vsel %vm146, %v322, %v320
    %v325 = vmul.f32 %v323, %v152
    %v326 = vmul.f32 %v324, %v153
    %327 = vst [vmem:[#allocation1] ss:$2 sm:$0xff] %v260
    %v328 = vld.sshfl [vmem:[#allocation1] sm:$0xff pattern:$0x75316420]
    %v329 = vld.sshfl [vmem:[#allocation1 + $0x8] sm:$0xff pattern:$0x75316420]
    %332 = vrot.lane.b32.xlu0 %v328, 113
    %v333 = vpop.permute.xlu0 %332
    %334 = vrot.lane.b32.xlu0 %v329, 113
    %v335 = vpop.permute.xlu0 %334
    %v336 = vsel %vm167, %v333, %v335
    %v337 = vsel %vm167, %v335, %v333
    %v338 = vmul.f32 %v336, %v173
    %v339 = vmul.f32 %v337, %v174
    %340 = vst [vmem:[#allocation1] ss:$2 sm:$0xff] %v260
    %v341 = vld.sshfl [vmem:[#allocation1] sm:$0xff pattern:$0x75316420]
    %v342 = vld.sshfl [vmem:[#allocation1 + $0x8] sm:$0xff pattern:$0x75316420]
    %345 = vrot.lane.b32.xlu0 %v341, 112
    %v346 = vpop.permute.xlu0 %345
    %347 = vrot.lane.b32.xlu0 %v342, 112
    %v348 = vpop.permute.xlu0 %347
    %v349 = vsel %vm188, %v346, %v348
    %v350 = vsel %vm188, %v348, %v346
    %v351 = vmul.f32 %v349, %v194
    %v352 = vmul.f32 %v350, %v195
    %353 = vst [vmem:[#allocation1] ss:$2 sm:$0xff] %v260
    %v354 = vld.sshfl [vmem:[#allocation1] sm:$0xff pattern:$0x75316420]
    %v355 = vld.sshfl [vmem:[#allocation1 + $0x8] sm:$0xff pattern:$0x75316420]
    %358 = vrot.lane.b32.xlu0 %v354, 111
    %v359 = vpop.permute.xlu0 %358
    %360 = vrot.lane.b32.xlu0 %v355, 111
    %v361 = vpop.permute.xlu0 %360
    %v362 = vsel %vm209, %v359, %v361
    %v363 = vsel %vm209, %v361, %v359
    %v364 = vmul.f32 %v362, %v215
    %v365 = vmul.f32 %v363, %v216
    %v368 = vrot.slane %v286, 4
    %v369 = vrot.slane %v287, 4
    %v374 = vrot.slane %v312, 4
    %v375 = vrot.slane %v313, 4
    %378 = vst [vmem:[#allocation1] ss:$2 sm:$0xff] %v260
    %v379 = vld.sshfl [vmem:[#allocation1] sm:$0xff pattern:$0x75316420]
    %v380 = vld.sshfl [vmem:[#allocation1 + $0x8] sm:$0xff pattern:$0x75316420]
    %v385 = vrot.slane %v325, 4
    %v386 = vrot.slane %v326, 4
    %v391 = vrot.slane %v351, 4
    %v392 = vrot.slane %v352, 4
    %v395 = vsel %vm250, %v273, %v368
    %v396 = vsel %vm250, %v274, %v369
    %v397 = vsel %vm250, %v299, %v374
    %v398 = vsel %vm250, %v300, %v375
    %v399 = vsel %vm250, %v379, %v385
    %v400 = vsel %vm250, %v380, %v386
    %v401 = vsel %vm250, %v338, %v391
    %v402 = vsel %vm250, %v339, %v392
    %v403 = vld [vmem:[%s1] sm:$0xff]
    %v404 = vld [vmem:[%s2] sm:$0xff]
    %406 = vset.pattern.permute.xlu0 0
    %407 = vperm.xlu0 %406, %v404
    %v408 = vpop.permute.xlu0 %407
    %vm410 = vcmask 293888
    %v412 = vsel %vm410, %v403, 0
    %v415 = vsel %vm250, %v219, 0
    %v418 = vsel %vm250, %v220, 0
    %v421 = vsel %vm250, %v364, 0
    %v424 = vsel %vm250, %v365, 0
    %426 = vmatpush.msra.mxu0 0.0
    %427 = vmatpush.msra.mxu0 0.0
    %428 = vmatpush.msra.mxu0 0.0
    %429 = vmatpush.msra.mxu0 0.0
    %430 = vmatpush.msra.mxu0 0.0
    %431 = vmatpush.msra.mxu0 0.0
    %432 = vmatpush.msra.mxu0 0.0
    %433 = vmatpush.msra.mxu0 0.0
    %434 = vmatpush.msra.mxu0 0.0
    %435 = vmatpush.msra.mxu0 0.0
    %436 = vmatpush.msra.mxu0 0.0
    %437 = vmatpush.msra.mxu0 %v415
    %438 = vmatpush.msra.mxu0 %v257
    %439 = vmatpush.msra.mxu0 %v255
    %440 = vmatpush.msra.mxu0 %v253
    %441 = vmatpush.msra.mxu0 %v251
    %442 = vmatmul.f32.gmra.mxu0 %v412
    %v443 = vpop.f32.mrf.mxu0
    %v444 = vadd.f32 %v408, %v443
    %445 = vdwg.mxu0
    %446 = vmatpush.msra.mxu0 0.0
    %447 = vmatpush.msra.mxu0 0.0
    %448 = vmatpush.msra.mxu0 0.0
    %449 = vmatpush.msra.mxu0 0.0
    %450 = vmatpush.msra.mxu0 0.0
    %451 = vmatpush.msra.mxu0 0.0
    %452 = vmatpush.msra.mxu0 0.0
    %453 = vmatpush.msra.mxu0 0.0
    %454 = vmatpush.msra.mxu0 0.0
    %455 = vmatpush.msra.mxu0 0.0
    %456 = vmatpush.msra.mxu0 0.0
    %457 = vmatpush.msra.mxu0 %v418
    %458 = vmatpush.msra.mxu0 %v258
    %459 = vmatpush.msra.mxu0 %v256
    %460 = vmatpush.msra.mxu0 %v254
    %461 = vmatpush.msra.mxu0 %v252
    %462 = vmatmul.f32.gmra.mxu0 %v412
    %v463 = vpop.f32.mrf.mxu0
    %v464 = vadd.f32 %v408, %v463
    %465 = vdwg.mxu0
    %466 = vmatpush.msra.mxu0 0.0
    %467 = vmatpush.msra.mxu0 0.0
    %468 = vmatpush.msra.mxu0 0.0
    %469 = vmatpush.msra.mxu0 0.0
    %470 = vmatpush.msra.mxu0 0.0
    %471 = vmatpush.msra.mxu0 0.0
    %472 = vmatpush.msra.mxu0 0.0
    %473 = vmatpush.msra.mxu0 0.0
    %474 = vmatpush.msra.mxu0 0.0
    %475 = vmatpush.msra.mxu0 0.0
    %476 = vmatpush.msra.mxu0 0.0
    %477 = vmatpush.msra.mxu0 %v421
    %478 = vmatpush.msra.mxu0 %v401
    %479 = vmatpush.msra.mxu0 %v399
    %480 = vmatpush.msra.mxu0 %v397
    %481 = vmatpush.msra.mxu0 %v395
    %482 = vmatmul.f32.gmra.mxu0 %v412
    %v483 = vpop.f32.mrf.mxu0
    %v484 = vadd.f32 %v408, %v483
    %485 = vdwg.mxu0
    %486 = vmatpush.msra.mxu0 0.0
    %487 = vmatpush.msra.mxu0 0.0
    %488 = vmatpush.msra.mxu0 0.0
    %489 = vmatpush.msra.mxu0 0.0
    %490 = vmatpush.msra.mxu0 0.0
    %491 = vmatpush.msra.mxu0 0.0
    %492 = vmatpush.msra.mxu0 0.0
    %493 = vmatpush.msra.mxu0 0.0
    %494 = vmatpush.msra.mxu0 0.0
    %495 = vmatpush.msra.mxu0 0.0
    %496 = vmatpush.msra.mxu0 0.0
    %497 = vmatpush.msra.mxu0 %v424
    %498 = vmatpush.msra.mxu0 %v402
    %499 = vmatpush.msra.mxu0 %v400
    %500 = vmatpush.msra.mxu0 %v398
    %501 = vmatpush.msra.mxu0 %v396
    %502 = vmatmul.f32.gmra.mxu0 %v412
    %v503 = vpop.f32.mrf.mxu0
    %v504 = vadd.f32 %v408, %v503
    %505 = vdwg.mxu0
    %v506 = vxor.u32 %v444, 2147483648
    %v507 = vxor.u32 %v464, 2147483648
    %v508 = vxor.u32 %v484, 2147483648
    %v509 = vxor.u32 %v504, 2147483648
    %v510 = vmul.f32 %v506, 1.442695
    %v511 = vpow.pop %v510
    %v512 = vmul.f32 %v507, 1.442695
    %v513 = vpow.pop %v512
    %v514 = vmul.f32 %v508, 1.442695
    %v515 = vpow.pop %v514
    %v516 = vmul.f32 %v509, 1.442695
    %v517 = vpow.pop %v516
    %v518 = vadd.f32 %v511, 1.0
    %v519 = vadd.f32 %v513, 1.0
    %v520 = vadd.f32 %v515, 1.0
    %v521 = vadd.f32 %v517, 1.0
    %v522 = vrcp.pop %v518
    %v523 = vmul.f32 %v518, %v522
    %v524 = vsub.f32 1.0, %v523
    %v525 = vmul.f32 %v522, %v524
    %v526 = vadd.f32 %v522, %v525
    %vm527 = vweird.f32 %v518
    %vm528 = vweird.f32 %v522
    %vm529 = vmor %vm527, %vm528
    %v530 = vsel %vm529, %v522, %v526
    %v531 = vand.u32 2147483647, %v518
    %vm532 = vcmp.eq.f32.partialorder %v531, 8.507059e+37
    %v533 = vand.u32 %v518, 2147483648
    %v534 = vor.u32 1.1754944e-38, %v533
    %v535 = vsel %vm532, %v534, %v530
    %v536 = vmul.f32 1.0, %v535
    %v537 = vrcp.pop %v519
    %v538 = vmul.f32 %v519, %v537
    %v539 = vsub.f32 1.0, %v538
    %v540 = vmul.f32 %v537, %v539
    %v541 = vadd.f32 %v537, %v540
    %vm542 = vweird.f32 %v519
    %vm543 = vweird.f32 %v537
    %vm544 = vmor %vm542, %vm543
    %v545 = vsel %vm544, %v537, %v541
    %v546 = vand.u32 2147483647, %v519
    %vm547 = vcmp.eq.f32.partialorder %v546, 8.507059e+37
    %v548 = vand.u32 %v519, 2147483648
    %v549 = vor.u32 1.1754944e-38, %v548
    %v550 = vsel %vm547, %v549, %v545
    %v551 = vmul.f32 1.0, %v550
    %v552 = vrcp.pop %v520
    %v553 = vmul.f32 %v520, %v552
    %v554 = vsub.f32 1.0, %v553
    %v555 = vmul.f32 %v552, %v554
    %v556 = vadd.f32 %v552, %v555
    %vm557 = vweird.f32 %v520
    %vm558 = vweird.f32 %v552
    %vm559 = vmor %vm557, %vm558
    %v560 = vsel %vm559, %v552, %v556
    %v561 = vand.u32 2147483647, %v520
    %vm562 = vcmp.eq.f32.partialorder %v561, 8.507059e+37
    %v563 = vand.u32 %v520, 2147483648
    %v564 = vor.u32 1.1754944e-38, %v563
    %v565 = vsel %vm562, %v564, %v560
    %v566 = vmul.f32 1.0, %v565
    %v567 = vrcp.pop %v521
    %v568 = vmul.f32 %v521, %v567
    %v569 = vsub.f32 1.0, %v568
    %v570 = vmul.f32 %v567, %v569
    %v571 = vadd.f32 %v567, %v570
    %vm572 = vweird.f32 %v521
    %vm573 = vweird.f32 %v567
    %vm574 = vmor %vm572, %vm573
    %v575 = vsel %vm574, %v567, %v571
    %v576 = vand.u32 2147483647, %v521
    %vm577 = vcmp.eq.f32.partialorder %v576, 8.507059e+37
    %v578 = vand.u32 %v521, 2147483648
    %v579 = vor.u32 1.1754944e-38, %v578
    %v580 = vsel %vm577, %v579, %v575
    %v581 = vmul.f32 1.0, %v580
    %v586 = vrot.slane %v536, 4
    %v587 = vrot.slane %v551, 4
    %v588 = vrot.slane %v566, 4
    %v589 = vrot.slane %v581, 4
    %v594 = vmul.f32 %v444, %v586
    %v595 = vmul.f32 %v464, %v587
    %v596 = vmul.f32 %v484, %v588
    %v597 = vmul.f32 %v504, %v589
    %v600 = vrot.slane %v595, 4
    %v601 = vsel %vm250, %v594, %v600
    %603 = vst [vmem:[#allocation7] sm:$0xff] %v601
    %v606 = vrot.slane %v597, 4
    %v607 = vsel %vm250, %v596, %v606
    %s609 = scalar_lea.vmem [#allocation7], 8
    %610 = vst [vmem:[%s609] sm:$0xff] %v607
    // Predicated region
    $region26: #{tpu_custom_call.1} parent=1 // pred_check
      _
    $region27: #{tpu_custom_call.1} parent=1 // pred_check_branch
      %612 = sbr.rel (0) target = $region29
    $region28: #{tpu_custom_call.1} parent=1 // pred_region
      %614 = vsyncadd [#allocation4], 0
      %s615 = sshll.u32 [#allocation7], 4
      %s616 = int_to_ptr.vmem [resolvable:$true] %s615
      %s617 = sshll.u32 %s4, 4
      %s618 = int_to_ptr.hbm [resolvable:$true] %s617
      %623 = dma.vmem_to_hbm [thread:$0]  %s616, 256, %s618, [#allocation4], 128, 128, 8
    $region29: #{tpu_custom_call.1} parent=1 // pred_fallthru
      _
    // Predicated region
    $region30: #{tpu_custom_call.1} parent=1 // pred_check
      _
    $region31: #{tpu_custom_call.1} parent=1 // pred_check_branch
      %625 = sbr.rel (0) target = $region33
    $region32: #{tpu_custom_call.1} parent=1 // pred_region
      %627 = dma.done [#allocation4], 256
    $region33: #{tpu_custom_call.1} parent=1 // pred_fallthru
      _
    %628 = vsyncpa [#allocation3], 1
    %629 = vsyncpa [#allocation6], 1
    %630 = vsyncpa [#allocation4], 1

</llo_original>
